<compile_context>
chip_gen: v5e
topology: v5e:2x2
jax: 0.10.0
libtpu: 0.0.40
codegen_flags: <defaults>
</compile_context>

<pallas_src>
import math

import jax
import jax.numpy as jnp
from jax.experimental import pallas as pl
from jax.experimental.pallas import tpu as pltpu


def _transition_kernel(x_ref, scale_ref, shift_ref, w_ref, o_ref):
    # x_ref:     (4, C, T)   4 positions of each 2x2 pool window x channels x
    #                        T flattened (n, ho, wo) lanes for this grid step
    # scale_ref: (1, C, 1)   folded BN scale  = gamma / sqrt(var + eps)
    # shift_ref: (1, C, 1)   folded BN shift  = beta - mean * scale
    # w_ref:     (Cout, C)   1x1 conv weight, pre-scaled by the 0.25 pool factor
    # o_ref:     (Cout, T)
    a = jnp.maximum(x_ref[...] * scale_ref[...] + shift_ref[...], 0.0)  # BN+ReLU (VPU)
    # 2x2 average pool = sum of the 4 window positions (exact f32, VPU only);
    # the 1/4 factor is folded into w in the wrapper.
    pooled = a[0] + a[1] + a[2] + a[3]                                  # (C, T)
    # 1x1 conv (MXU).  Pool-first => 4x fewer MXU MACs than conv-first.
    y = jnp.dot(w_ref[...], pooled,
                preferred_element_type=jnp.float32,
                precision=jax.lax.Precision.HIGHEST)
    o_ref[...] = y.astype(o_ref.dtype)


def _choose_lane_tile(total, c, *, bytes_per_elem=4, target_block_bytes=4 << 20):
    """Pick a lane tile: multiple of 128 that divides `total`, capped so the
    (4, C, tile) input block stays ~<= target_block_bytes (double-buffered)."""
    cap = (target_block_bytes // (4 * c * bytes_per_elem)) // 128 * 128
    max_tile = max(128, min(2048, cap))
    if total <= max_tile:
        return total, 1
    for t in range(max_tile, 127, -128):
        if total % t == 0:
            return t, total // t
    # TODO(synk): pad the flattened lane axis to a multiple of 128 instead of
    # falling back to one full-extent step for awkward N*Ho*Wo values.
    return total, 1


def transition_pallas(x, gamma, beta, running_mean, running_var, conv_w, *, eps=1e-5):
    """Pallas implementation of Transition.forward (BN in inference mode)."""
    N, C, H, W = x.shape
    Cout = conv_w.shape[0]
    Ho, Wo = H // 2, W // 2

    # Fold BatchNorm (running stats) into per-channel scale+shift; fold the
    # 2x2-average 0.25 factor into the tiny conv weight.
    inv_std = 1.0 / jnp.sqrt(running_var.astype(jnp.float32) + eps)
    scale = (gamma * inv_std).reshape(1, C, 1).astype(jnp.float32)
    shift = (beta - running_mean * gamma * inv_std).reshape(1, C, 1).astype(jnp.float32)
    w2d = (conv_w.reshape(Cout, C) * 0.25).astype(jnp.float32)

    # Wrapper-side layout plumbing: expose the 4 positions of every 2x2 pool
    # window as a leading axis and flatten (n, ho, wo) into one lane-dense
    # axis.  avg_pool2d(., 2) floors, so trailing odd rows/cols are dropped.
    xc = x[:, :, :2 * Ho, :2 * Wo]
    x_r = xc.reshape(N, C, Ho, 2, Wo, 2)
    x_r = x_r.transpose(3, 5, 1, 0, 2, 4)            # (2, 2, C, N, Ho, Wo)
    T_total = N * Ho * Wo
    x_r = x_r.reshape(4, C, T_total)                 # (4, C, N*Ho*Wo)

    tile, grid_t = _choose_lane_tile(T_total, C)

    out_flat = pl.pallas_call(
        _transition_kernel,
        out_shape=jax.ShapeDtypeStruct((Cout, T_total), x.dtype),
        grid=(grid_t,),
        in_specs=[
            pl.BlockSpec((4, C, tile), lambda i: (0, 0, i)),   # activations
            pl.BlockSpec((1, C, 1), lambda i: (0, 0, 0)),      # BN scale (shared)
            pl.BlockSpec((1, C, 1), lambda i: (0, 0, 0)),      # BN shift (shared)
            pl.BlockSpec((Cout, C), lambda i: (0, 0)),         # conv weight (shared)
        ],
        out_specs=pl.BlockSpec((Cout, tile), lambda i: (0, i)),
        compiler_params=pltpu.CompilerParams(
            dimension_semantics=("parallel",)),
    )(x_r, scale, shift, w2d)

    # (Cout, N*Ho*Wo) -> (N, Cout, Ho, Wo)
    return out_flat.reshape(Cout, N, Ho, Wo).transpose(1, 0, 2, 3)


def transition_ref(x, gamma, beta, running_mean, running_var, conv_w, *, eps=1e-5):
    """Pure-JAX reference of the PyTorch forward (BN inference mode)."""
    inv_std = 1.0 / jnp.sqrt(running_var[None, :, None, None] + eps)
    xn = (x - running_mean[None, :, None, None]) * inv_std * gamma[None, :, None, None] \
         + beta[None, :, None, None]
    a = jnp.maximum(xn, 0.0)
    w2d = conv_w.reshape(conv_w.shape[0], conv_w.shape[1])
    y = jnp.einsum("oc,nchw->nohw", w2d, a, precision=jax.lax.Precision.HIGHEST)
    N, Co, H, W = y.shape
    return y.reshape(N, Co, H // 2, 2, W // 2, 2).mean(axis=(3, 5))


if __name__ == "__main__":
    key = jax.random.PRNGKey(0)
    k1, k2, k3, k4, k5, k6 = jax.random.split(key, 6)

    # Small shapes consistent with the module: batch=2, in_planes=4, 16x16,
    # out_planes=8 -> output (2, 8, 8, 8).
    N, C, H, W = 2, 4, 16, 16
    Cout = 8

    x = jax.random.normal(k1, (N, C, H, W), dtype=jnp.float32)
    gamma = 1.0 + 0.1 * jax.random.normal(k2, (C,), dtype=jnp.float32)
    beta = 0.1 * jax.random.normal(k3, (C,), dtype=jnp.float32)
    running_mean = 0.1 * jax.random.normal(k4, (C,), dtype=jnp.float32)
    running_var = jnp.abs(1.0 + 0.1 * jax.random.normal(k5, (C,), dtype=jnp.float32))
    conv_w = jax.random.normal(k6, (Cout, C, 1, 1), dtype=jnp.float32) / math.sqrt(C)

    out = transition_pallas(x, gamma, beta, running_mean, running_var, conv_w)
    out = jax.block_until_ready(out)

    ref = transition_ref(x, gamma, beta, running_mean, running_var, conv_w)
    assert out.shape == ref.shape, (out.shape, ref.shape)
    assert jnp.allclose(out, ref, atol=1e-4, rtol=1e-4), \
        float(jnp.max(jnp.abs(out - ref)))

    print("KERNEL_OK")
</pallas_src>

<mosaic_0001>
module attributes {stable_mosaic.version = 11 : i64} {
  func.func @_transition_kernel(%arg0: i32, %arg1: memref<4x4x128xf32, #tpu.memory_space<vmem>>, %arg2: memref<1x4x1xf32, #tpu.memory_space<vmem>>, %arg3: memref<1x4x1xf32, #tpu.memory_space<vmem>>, %arg4: memref<8x4xf32, #tpu.memory_space<vmem>>, %arg5: memref<8x128xf32, #tpu.memory_space<vmem>>) attributes {dimension_semantics = [#tpu.dimension_semantics<parallel>], iteration_bounds = array<i64: 1>, scalar_prefetch = 0 : i64, scratch_operands = 0 : i64, tpu.core_type = #tpu.core_type<tc>, window_params = [{transform_indices = @transform_0, window_bounds = array<i64: 4, 4, 128>}, {pipeline_mode = #tpu.pipeline_mode<synchronous>, transform_indices = @transform_1, window_bounds = array<i64: 1, 4, 1>}, {pipeline_mode = #tpu.pipeline_mode<synchronous>, transform_indices = @transform_2, window_bounds = array<i64: 1, 4, 1>}, {pipeline_mode = #tpu.pipeline_mode<synchronous>, transform_indices = @transform_3, window_bounds = array<i64: 8, 4>}, {transform_indices = @transform_4, window_bounds = array<i64: 8, 128>}]} {
    %c0 = arith.constant 0 : index
    %c0_0 = arith.constant 0 : index
    %c0_1 = arith.constant 0 : index
    %0 = vector.load %arg1[%c0, %c0_0, %c0_1] : memref<4x4x128xf32, #tpu.memory_space<vmem>>, vector<4x4x128xf32>
    %c0_2 = arith.constant 0 : index
    %c0_3 = arith.constant 0 : index
    %c0_4 = arith.constant 0 : index
    %1 = vector.load %arg2[%c0_2, %c0_3, %c0_4] : memref<1x4x1xf32, #tpu.memory_space<vmem>>, vector<1x4x1xf32>
    %2 = vector.broadcast %1 : vector<1x4x1xf32> to vector<4x4x128xf32>
    %3 = arith.mulf %0, %2 : vector<4x4x128xf32>
    %c0_5 = arith.constant 0 : index
    %c0_6 = arith.constant 0 : index
    %c0_7 = arith.constant 0 : index
    %4 = vector.load %arg3[%c0_5, %c0_6, %c0_7] : memref<1x4x1xf32, #tpu.memory_space<vmem>>, vector<1x4x1xf32>
    %5 = vector.broadcast %4 : vector<1x4x1xf32> to vector<4x4x128xf32>
    %6 = arith.addf %3, %5 : vector<4x4x128xf32>
    %cst = arith.constant 0.000000e+00 : f32
    %7 = vector.broadcast %cst : f32 to vector<4x4x128xf32>
    %8 = arith.maximumf %6, %7 : vector<4x4x128xf32>
    %9 = vector.extract_strided_slice %8 {offsets = [0, 0, 0], sizes = [1, 4, 128], strides = [1, 1, 1]} : vector<4x4x128xf32> to vector<1x4x128xf32>
    %10 = vector.shape_cast %9 : vector<1x4x128xf32> to vector<4x128xf32>
    %11 = vector.extract_strided_slice %8 {offsets = [1, 0, 0], sizes = [1, 4, 128], strides = [1, 1, 1]} : vector<4x4x128xf32> to vector<1x4x128xf32>
    %12 = vector.shape_cast %11 : vector<1x4x128xf32> to vector<4x128xf32>
    %13 = arith.addf %10, %12 : vector<4x128xf32>
    %14 = vector.extract_strided_slice %8 {offsets = [2, 0, 0], sizes = [1, 4, 128], strides = [1, 1, 1]} : vector<4x4x128xf32> to vector<1x4x128xf32>
    %15 = vector.shape_cast %14 : vector<1x4x128xf32> to vector<4x128xf32>
    %16 = arith.addf %13, %15 : vector<4x128xf32>
    %17 = vector.extract_strided_slice %8 {offsets = [3, 0, 0], sizes = [1, 4, 128], strides = [1, 1, 1]} : vector<4x4x128xf32> to vector<1x4x128xf32>
    %18 = vector.shape_cast %17 : vector<1x4x128xf32> to vector<4x128xf32>
    %19 = arith.addf %16, %18 : vector<4x128xf32>
    %c0_8 = arith.constant 0 : index
    %c0_9 = arith.constant 0 : index
    %20 = vector.load %arg4[%c0_8, %c0_9] : memref<8x4xf32, #tpu.memory_space<vmem>>, vector<8x4xf32>
    %cst_10 = arith.constant dense<0.000000e+00> : vector<8x128xf32>
    %21 = tpu.matmul %20, %19, %cst_10 {dimension_numbers = #tpu.dot_dimension_numbers<[1], [0], [0], [1], [0, 0, 1, 1], [], []>, precision = #tpu.contract_precision<fp32>} : vector<8x4xf32>, vector<4x128xf32>, vector<8x128xf32> -> vector<8x128xf32>
    %c0_11 = arith.constant 0 : index
    %c0_12 = arith.constant 0 : index
    %22 = vector.load %arg5[%c0_11, %c0_12] : memref<8x128xf32, #tpu.memory_space<vmem>>, vector<8x128xf32>
    tpu.vector_store %arg5[%c0_11, %c0_12], %21 {strides = array<i32>} : memref<8x128xf32, #tpu.memory_space<vmem>>, vector<8x128xf32>,
    return
  }
  func.func @transform_0(%arg0: i32) -> (i32, i32, i32) {
    %c0_i32 = arith.constant 0 : i32
    %c0_i32_0 = arith.constant 0 : i32
    %c0_i32_1 = arith.constant 0 : i32
    return %c0_i32, %c0_i32_0, %arg0 : i32, i32, i32
  }
  func.func @transform_1(%arg0: i32) -> (i32, i32, i32) {
    %c0_i32 = arith.constant 0 : i32
    %c0_i32_0 = arith.constant 0 : i32
    %c0_i32_1 = arith.constant 0 : i32
    %c0_i32_2 = arith.constant 0 : i32
    return %c0_i32, %c0_i32_0, %c0_i32_1 : i32, i32, i32
  }
  func.func @transform_2(%arg0: i32) -> (i32, i32, i32) {
    %c0_i32 = arith.constant 0 : i32
    %c0_i32_0 = arith.constant 0 : i32
    %c0_i32_1 = arith.constant 0 : i32
    %c0_i32_2 = arith.constant 0 : i32
    return %c0_i32, %c0_i32_0, %c0_i32_1 : i32, i32, i32
  }
  func.func @transform_3(%arg0: i32) -> (i32, i32) {
    %c0_i32 = arith.constant 0 : i32
    %c0_i32_0 = arith.constant 0 : i32
    %c0_i32_1 = arith.constant 0 : i32
    return %c0_i32, %c0_i32_0 : i32, i32
  }
  func.func @transform_4(%arg0: i32) -> (i32, i32) {
    %c0_i32 = arith.constant 0 : i32
    %c0_i32_0 = arith.constant 0 : i32
    return %c0_i32, %arg0 : i32, i32
  }
}

</mosaic_0001>

<llo_original>
// kernel: tpu_custom_call.1
$region0: #{tpu_custom_call.1}
  #allocation0 [shape = 'u32[]', space=smem, size = 0x4, offset = 0x4, fixed_abs, tag = 'smem constant byte address 0x4 - core index']
  #allocation1 [shape = 'u32[72,128]{1,0:T(1,128)}', space=vmem, size = 0x9000, scoped, tag = 'internal scratch']
  %s0 = inlined_call_operand.vmem [shape: f32[4,4,128], index: 0, kind: input, shape index: {}]
  %s1 = inlined_call_operand.vmem [shape: f32[1,4,1], index: 1, kind: input, shape index: {}]
  %s2 = inlined_call_operand.vmem [shape: f32[1,4,1], index: 2, kind: input, shape index: {}]
  %s3 = inlined_call_operand.vmem [shape: f32[8,4], index: 3, kind: input, shape index: {}]
  %s4 = inlined_call_operand.hbm [shape: f32[8,128], index: 4, kind: output, shape index: {}]
  %s5 = sld [smem:[#allocation0]]
  $region26: #{tpu_custom_call.1} parent=0
    _
  %s7 = ssub.s32 1, %s5
  %s8 = scalar_select 0, %s7, %s5
  $region1: #{tpu_custom_call.1} parent=0
    #allocation2 [shape = 'u8[4096]{0}', space=vmem, size = 0x1000, scoped, tag = 'output window, operand 0, single buffered']
    #allocation3 [shape = 's32[1]{0}', space=sflag, size = 0x4, scoped, tag = 'scoped memory for tpu_custom_call.1']
    %9 = vsyncpa [#allocation3], 0
    // Predicated region
    $region2: #{tpu_custom_call.1} parent=1 // pred_check
      _
    $region3: #{tpu_custom_call.1} parent=1 // pred_check_branch
      %11 = sbr.rel (0) target = $region5
    $region4: #{tpu_custom_call.1} parent=1 // pred_region
      _
    $region5: #{tpu_custom_call.1} parent=1 // pred_fallthru
      _
    // Predicated region
    $region6: #{tpu_custom_call.1} parent=1 // pred_check
      _
    $region7: #{tpu_custom_call.1} parent=1 // pred_check_branch
      %13 = sbr.rel (0) target = $region9
    $region8: #{tpu_custom_call.1} parent=1 // pred_region
      _
    $region9: #{tpu_custom_call.1} parent=1 // pred_fallthru
      _
    // Predicated region
    $region10: #{tpu_custom_call.1} parent=1 // pred_check
      _
    $region11: #{tpu_custom_call.1} parent=1 // pred_check_branch
      %15 = sbr.rel (0) target = $region13
    $region12: #{tpu_custom_call.1} parent=1 // pred_region
      _
    $region13: #{tpu_custom_call.1} parent=1 // pred_fallthru
      _
    // Predicated region
    $region14: #{tpu_custom_call.1} parent=1 // pred_check
      _
    $region15: #{tpu_custom_call.1} parent=1 // pred_check_branch
      %17 = sbr.rel (0) target = $region17
    $region16: #{tpu_custom_call.1} parent=1 // pred_region
      _
    $region17: #{tpu_custom_call.1} parent=1 // pred_fallthru
      _
    %v18 = vld [vmem:[%s0] sm:$0xf]
    %v19 = vld [vmem:[%s0 + $0x4] sm:$0xf]
    %v20 = vld [vmem:[%s0 + $0x8] sm:$0xf]
    %v21 = vld [vmem:[%s0 + $0xc] sm:$0xf]
    %v22 = vld [vmem:[%s1] sm:$0xf]
    %24 = vset.pattern.permute.xlu0 0
    %25 = vperm.xlu0 %24, %v22
    %v26 = vpop.permute.xlu0 %25
    %v28 = vmul.f32 %v18, %v26
    %v29 = vmul.f32 %v19, %v26
    %v30 = vmul.f32 %v20, %v26
    %v31 = vmul.f32 %v21, %v26
    %v32 = vld [vmem:[%s2] sm:$0xf]
    %34 = vset.pattern.permute.xlu0 0
    %35 = vperm.xlu0 %34, %v32
    %v36 = vpop.permute.xlu0 %35
    %v38 = vadd.f32 %v28, %v36
    %v39 = vadd.f32 %v29, %v36
    %v40 = vadd.f32 %v30, %v36
    %v41 = vadd.f32 %v31, %v36
    %v42 = vmax.f32 %v38, 0.0
    %v43 = vmax.f32 %v39, 0.0
    %v44 = vmax.f32 %v40, 0.0
    %v45 = vmax.f32 %v41, 0.0
    %v46 = vadd.f32 %v42, %v43
    %v47 = vadd.f32 %v46, %v44
    %v48 = vadd.f32 %v47, %v45
    %v49 = vld [vmem:[%s3] sm:$0xff]
    %vm50 = vcmask 31744
    %v52 = vsel %vm50, %v49, 0
    %vm54 = vcmask 1043456
    %v56 = vsel %vm54, %v48, 0
    %58 = vmatpush.msra.mxu0 0.0
    %59 = vmatpush.msra.mxu0 0.0
    %60 = vmatpush.msra.mxu0 0.0
    %61 = vmatpush.msra.mxu0 0.0
    %62 = vmatpush.msra.mxu0 0.0
    %63 = vmatpush.msra.mxu0 0.0
    %64 = vmatpush.msra.mxu0 0.0
    %65 = vmatpush.msra.mxu0 0.0
    %66 = vmatpush.msra.mxu0 0.0
    %67 = vmatpush.msra.mxu0 0.0
    %68 = vmatpush.msra.mxu0 0.0
    %69 = vmatpush.msra.mxu0 0.0
    %70 = vmatpush.msra.mxu0 0.0
    %71 = vmatpush.msra.mxu0 0.0
    %72 = vmatpush.msra.mxu0 0.0
    %v73 = vand.u32 %v56, 4294901760
    %74 = vmatpush.msra.mxu0 %v73
    %v75 = vand.u32 %v52, 4294901760
    %v76 = vsub.f32 %v52, %v75
    %v77 = vand.u32 %v76, 4294901760
    %v78 = vsub.f32 %v76, %v77
    %v79 = vand.u32 %v78, 4294901760
    %80 = vmatmul.f32.gmra.mxu0 %v79
    %v81 = vpop.f32.mrf.mxu0
    %v82 = vadd.f32 0.0, %v81
    %83 = vdwg.mxu0
    %84 = vmatpush.msra.mxu0 0.0
    %85 = vmatpush.msra.mxu0 0.0
    %86 = vmatpush.msra.mxu0 0.0
    %87 = vmatpush.msra.mxu0 0.0
    %88 = vmatpush.msra.mxu0 0.0
    %89 = vmatpush.msra.mxu0 0.0
    %90 = vmatpush.msra.mxu0 0.0
    %91 = vmatpush.msra.mxu0 0.0
    %92 = vmatpush.msra.mxu0 0.0
    %93 = vmatpush.msra.mxu0 0.0
    %94 = vmatpush.msra.mxu0 0.0
    %95 = vmatpush.msra.mxu0 0.0
    %96 = vmatpush.msra.mxu0 0.0
    %97 = vmatpush.msra.mxu0 0.0
    %98 = vmatpush.msra.mxu0 0.0
    %v99 = vand.u32 %v56, 4294901760
    %v100 = vsub.f32 %v56, %v99
    %v101 = vand.u32 %v100, 4294901760
    %v102 = vsub.f32 %v100, %v101
    %v103 = vand.u32 %v102, 4294901760
    %104 = vmatpush.msra.mxu0 %v103
    %v105 = vand.u32 %v52, 4294901760
    %106 = vmatmul.f32.gmra.mxu0 %v105
    %v107 = vpop.f32.mrf.mxu0
    %v108 = vadd.f32 %v82, %v107
    %109 = vdwg.mxu0
    %110 = vmatpush.msra.mxu0 0.0
    %111 = vmatpush.msra.mxu0 0.0
    %112 = vmatpush.msra.mxu0 0.0
    %113 = vmatpush.msra.mxu0 0.0
    %114 = vmatpush.msra.mxu0 0.0
    %115 = vmatpush.msra.mxu0 0.0
    %116 = vmatpush.msra.mxu0 0.0
    %117 = vmatpush.msra.mxu0 0.0
    %118 = vmatpush.msra.mxu0 0.0
    %119 = vmatpush.msra.mxu0 0.0
    %120 = vmatpush.msra.mxu0 0.0
    %121 = vmatpush.msra.mxu0 0.0
    %122 = vmatpush.msra.mxu0 0.0
    %123 = vmatpush.msra.mxu0 0.0
    %124 = vmatpush.msra.mxu0 0.0
    %v125 = vand.u32 %v56, 4294901760
    %v126 = vsub.f32 %v56, %v125
    %127 = vmatpush.msra.mxu0 %v126
    %v128 = vand.u32 %v52, 4294901760
    %v129 = vsub.f32 %v52, %v128
    %130 = vmatmul.f32.gmra.mxu0 %v129
    %v131 = vpop.f32.mrf.mxu0
    %v132 = vadd.f32 %v108, %v131
    %133 = vdwg.mxu0
    %134 = vmatpush.msra.mxu0 0.0
    %135 = vmatpush.msra.mxu0 0.0
    %136 = vmatpush.msra.mxu0 0.0
    %137 = vmatpush.msra.mxu0 0.0
    %138 = vmatpush.msra.mxu0 0.0
    %139 = vmatpush.msra.mxu0 0.0
    %140 = vmatpush.msra.mxu0 0.0
    %141 = vmatpush.msra.mxu0 0.0
    %142 = vmatpush.msra.mxu0 0.0
    %143 = vmatpush.msra.mxu0 0.0
    %144 = vmatpush.msra.mxu0 0.0
    %145 = vmatpush.msra.mxu0 0.0
    %146 = vmatpush.msra.mxu0 0.0
    %147 = vmatpush.msra.mxu0 0.0
    %148 = vmatpush.msra.mxu0 0.0
    %v149 = vand.u32 %v56, 4294901760
    %150 = vmatpush.msra.mxu0 %v149
    %v151 = vand.u32 %v52, 4294901760
    %v152 = vsub.f32 %v52, %v151
    %v153 = vand.u32 %v152, 4294901760
    %154 = vmatmul.f32.gmra.mxu0 %v153
    %v155 = vpop.f32.mrf.mxu0
    %v156 = vadd.f32 %v132, %v155
    %157 = vdwg.mxu0
    %158 = vmatpush.msra.mxu0 0.0
    %159 = vmatpush.msra.mxu0 0.0
    %160 = vmatpush.msra.mxu0 0.0
    %161 = vmatpush.msra.mxu0 0.0
    %162 = vmatpush.msra.mxu0 0.0
    %163 = vmatpush.msra.mxu0 0.0
    %164 = vmatpush.msra.mxu0 0.0
    %165 = vmatpush.msra.mxu0 0.0
    %166 = vmatpush.msra.mxu0 0.0
    %167 = vmatpush.msra.mxu0 0.0
    %168 = vmatpush.msra.mxu0 0.0
    %169 = vmatpush.msra.mxu0 0.0
    %170 = vmatpush.msra.mxu0 0.0
    %171 = vmatpush.msra.mxu0 0.0
    %172 = vmatpush.msra.mxu0 0.0
    %v173 = vand.u32 %v56, 4294901760
    %v174 = vsub.f32 %v56, %v173
    %v175 = vand.u32 %v174, 4294901760
    %176 = vmatpush.msra.mxu0 %v175
    %v177 = vand.u32 %v52, 4294901760
    %178 = vmatmul.f32.gmra.mxu0 %v177
    %v179 = vpop.f32.mrf.mxu0
    %v180 = vadd.f32 %v156, %v179
    %181 = vdwg.mxu0
    %182 = vmatpush.msra.mxu0 0.0
    %183 = vmatpush.msra.mxu0 0.0
    %184 = vmatpush.msra.mxu0 0.0
    %185 = vmatpush.msra.mxu0 0.0
    %186 = vmatpush.msra.mxu0 0.0
    %187 = vmatpush.msra.mxu0 0.0
    %188 = vmatpush.msra.mxu0 0.0
    %189 = vmatpush.msra.mxu0 0.0
    %190 = vmatpush.msra.mxu0 0.0
    %191 = vmatpush.msra.mxu0 0.0
    %192 = vmatpush.msra.mxu0 0.0
    %193 = vmatpush.msra.mxu0 0.0
    %194 = vmatpush.msra.mxu0 0.0
    %195 = vmatpush.msra.mxu0 0.0
    %196 = vmatpush.msra.mxu0 0.0
    %v197 = vand.u32 %v56, 4294901760
    %198 = vmatpush.msra.mxu0 %v197
    %v199 = vand.u32 %v52, 4294901760
    %200 = vmatmul.f32.gmra.mxu0 %v199
    %v201 = vpop.f32.mrf.mxu0
    %v202 = vadd.f32 %v180, %v201
    %203 = vdwg.mxu0
    %204 = vst [vmem:[#allocation2] sm:$0xff] %v202
    // Predicated region
    $region18: #{tpu_custom_call.1} parent=1 // pred_check
      _
    $region19: #{tpu_custom_call.1} parent=1 // pred_check_branch
      %206 = sbr.rel (0) target = $region21
    $region20: #{tpu_custom_call.1} parent=1 // pred_region
      %208 = vsyncadd [#allocation3], 0
      %s210 = sshll.u32 [#allocation2], 4
      %s211 = int_to_ptr.vmem [resolvable:$true] %s210
      %s212 = sshll.u32 %s4, 4
      %s213 = int_to_ptr.hbm [resolvable:$true] %s212
      %215 = dma.vmem_to_hbm [thread:$0]  %s211, 128, %s213, [#allocation3]
    $region21: #{tpu_custom_call.1} parent=1 // pred_fallthru
      _
    // Predicated region
    $region22: #{tpu_custom_call.1} parent=1 // pred_check
      _
    $region23: #{tpu_custom_call.1} parent=1 // pred_check_branch
      %217 = sbr.rel (0) target = $region25
    $region24: #{tpu_custom_call.1} parent=1 // pred_region
      %219 = dma.done [#allocation3], 128
    $region25: #{tpu_custom_call.1} parent=1 // pred_fallthru
      _
    %220 = vsyncpa [#allocation3], 1

</llo_original>
